<compile_context>
chip_gen: v6e
topology: v6e:2x2x1
jax: 0.10.0
libtpu: 0.0.40
codegen_flags: <defaults>
</compile_context>

<pallas_src>
import math

import jax
import jax.numpy as jnp
from jax.experimental import pallas as pl
from jax.experimental.pallas import tpu as pltpu

MAX_PERIOD = 10000.0
_MAX_TM = 1024          # row-tile cap (MXU streams M; cap only bounds VMEM use)
_SINGLE_TILE_N = 512    # below this padded batch size the kernel is weight-
                        # fetch bound -> keep grid=(1,) and overlap the w2 DMA


def _round_up(x, m):
    return (x + m - 1) // m * m


# -----------------------------------------------------------------------------
# kernels
# -----------------------------------------------------------------------------
def _mlp_body(t_ref, freqs_ref, w1_ref, b1_ref, b2_ref, out_ref, get_w2):
    """Shared compute: sinusoid -> Linear -> SiLU -> Linear (+ biases)."""
    t = t_ref[...]                        # (TM, 1)     f32
    freqs = freqs_ref[...]                # (1, half)   f32
    w1 = w1_ref[...]                      # (F, H)      bf16

    # Sinusoidal embedding: keep args/cos/sin in f32 (t*freqs reaches ~1e3);
    # cast to bf16 only for the concat buffer / MXU operand.
    args = t * freqs                                                    # (TM, half)
    emb = jnp.concatenate(
        [jnp.cos(args).astype(w1.dtype), jnp.sin(args).astype(w1.dtype)],
        axis=-1)                                                        # (TM, F) bf16

    # mlp[0]: Linear(F -> H); bf16 MXU operands, f32 accumulation.
    h = jnp.dot(emb, w1, preferred_element_type=jnp.float32) + b1_ref[...]
    # mlp[1]: SiLU in f32 (sigmoid runs on the EUP).
    h = h * jax.nn.sigmoid(h)

    # mlp[2]: Linear(H -> H).
    w2 = get_w2()                                                       # bf16
    o = jnp.dot(h.astype(w2.dtype), w2, preferred_element_type=jnp.float32)
    out_ref[...] = (o + b2_ref[...]).astype(out_ref.dtype)


def _kernel_resident(t_ref, freqs_ref, w1_ref, b1_ref, w2_ref, b2_ref, out_ref):
    """Multi-tile path: w2 is a VMEM-resident BlockSpec input."""
    _mlp_body(t_ref, freqs_ref, w1_ref, b1_ref, b2_ref, out_ref,
              lambda: w2_ref[...])


def _kernel_overlap(t_ref, freqs_ref, w1_ref, b1_ref, w2_hbm_ref, b2_ref,
                    out_ref, w2_vmem, sem):
    """Single-tile path: start the w2 HBM->VMEM DMA at kernel entry so it
    overlaps the sinusoid + first matmul; wait right before the second dot."""
    cp = pltpu.make_async_copy(w2_hbm_ref, w2_vmem, sem)
    cp.start()

    def get_w2():
        cp.wait()
        return w2_vmem[...]

    _mlp_body(t_ref, freqs_ref, w1_ref, b1_ref, b2_ref, out_ref, get_w2)


# -----------------------------------------------------------------------------
# wrapper
# -----------------------------------------------------------------------------
def timestep_embedder(t, params, *, matmul_dtype=jnp.bfloat16,
                      out_dtype=jnp.float32):
    """t: (N,) float timesteps.  params: weights stored channels-last (in, out).

    matmul_dtype=bf16 deviates from PyTorch's pure-f32 math (f32 accumulation
    keeps the error ~1e-2 for these magnitudes); pass jnp.float32 if the
    embedding feeds a precision-sensitive conditioning path.
    """
    w1 = params["w1"].astype(jnp.float32)      # (F, H)
    w2 = params["w2"].astype(jnp.float32)      # (H, H)
    b1 = params["b1"].astype(jnp.float32)      # (H,)
    b2 = params["b2"].astype(jnp.float32)      # (H,)
    F, H = w1.shape

    # Odd frequency_embedding_size: PyTorch appends a zero embedding column,
    # which is equivalent to dropping w1's last input row.
    if F % 2:
        w1 = w1[:-1]
        F -= 1
    half = F // 2

    # --- lane-align H and half to multiples of 128 (zero padding is inert) ---
    H_p = _round_up(H, 128)
    if H_p != H:
        w1 = jnp.pad(w1, ((0, 0), (0, H_p - H)))
        b1 = jnp.pad(b1, (0, H_p - H))
        w2 = jnp.pad(w2, ((0, H_p - H), (0, H_p - H)))
        b2 = jnp.pad(b2, (0, H_p - H))

    freqs = jnp.exp(
        -math.log(MAX_PERIOD) * jnp.arange(half, dtype=jnp.float32) / half)
    half_p = _round_up(half, 128)
    if half_p != half:
        # Padded freqs are 0 -> cos column is 1, but the matching w1 rows are
        # zero so the contribution vanishes; sin(0) columns are 0 anyway.
        freqs = jnp.pad(freqs, (0, half_p - half))
        zrow = jnp.zeros((half_p - half, H_p), w1.dtype)
        w1 = jnp.concatenate([w1[:half], zrow, w1[half:], zrow], axis=0)
    F_p = 2 * half_p
    freqs = freqs.reshape(1, half_p)

    # --- row tiling ----------------------------------------------------------
    N = t.shape[0]
    padded_min = _round_up(max(N, 1), 8)
    if padded_min <= _SINGLE_TILE_N:
        # Weight-fetch-bound regime: one grid step; w2 DMA overlapped manually.
        n_tiles = 1
    else:
        # Compute-bound regime: >= 2 balanced tiles so v7x megacore gets work
        # on both TensorCores; per-step overhead (~0.35 us) stays negligible.
        n_tiles = max(2, pl.cdiv(padded_min, _MAX_TM))
    TM = min(_MAX_TM, _round_up(pl.cdiv(padded_min, n_tiles), 8))
    n_tiles = pl.cdiv(padded_min, TM)
    padded_n = n_tiles * TM

    t2 = t.astype(jnp.float32).reshape(N, 1)
    if padded_n != N:
        t2 = jnp.pad(t2, ((0, padded_n - N), (0, 0)))   # pad rows: t=0, harmless

    w1m = w1.astype(matmul_dtype)
    w2m = w2.astype(matmul_dtype)
    b1r = b1.reshape(1, H_p)
    b2r = b2.reshape(1, H_p)

    overlap_w2 = n_tiles == 1

    cost = pl.CostEstimate(
        flops=2 * padded_n * (F_p * H_p + H_p * H_p),
        transcendentals=padded_n * (F_p + H_p),          # cos/sin + sigmoid
        bytes_accessed=(padded_n * (1 + H_p) * 4
                        + (F_p * H_p + H_p * H_p) * 2
                        + (half_p + 2 * H_p) * 4),
    )

    # VMEM budget: single-buffered resident weights + double-buffered t/out
    # tiles + in-kernel temporaries, 2x headroom, clamped to v7x physical VMEM.
    est = ((F_p * H_p + H_p * H_p) * 2                   # bf16 weights
           + 2 * TM * (1 + H_p) * 4                      # t / out double buffers
           + TM * (2 * F_p + 6 * H_p) * 4)               # emb + f32 temporaries
    vmem_limit = int(min(max(2 * est, 32 << 20), 64 << 20))

    def build(single_buffer_weights):
        def resident(shape):
            # Constant index map -> fetched once; no need for double buffers.
            if single_buffer_weights:
                return pl.BlockSpec(shape, lambda i: (0, 0),
                                    pipeline_mode=pl.Buffered(1))
            return pl.BlockSpec(shape, lambda i: (0, 0))

        in_specs = [
            pl.BlockSpec((TM, 1), lambda i: (i, 0)),      # t       (row-tiled)
            resident((1, half_p)),                        # freqs   (resident)
            resident((F_p, H_p)),                         # w1 bf16 (resident)
            resident((1, H_p)),                           # b1      (resident)
            (pl.BlockSpec(memory_space=pl.ANY) if overlap_w2
             else resident((H_p, H_p))),                  # w2 bf16
            resident((1, H_p)),                           # b2      (resident)
        ]
        scratch = ([pltpu.VMEM((H_p, H_p), matmul_dtype),
                    pltpu.SemaphoreType.DMA(())] if overlap_w2 else [])
        return pl.pallas_call(
            _kernel_overlap if overlap_w2 else _kernel_resident,
            out_shape=jax.ShapeDtypeStruct((padded_n, H_p), out_dtype),
            grid=(n_tiles,),
            in_specs=in_specs,
            out_specs=pl.BlockSpec((TM, H_p), lambda i: (i, 0)),
            scratch_shapes=scratch,
            compiler_params=pltpu.CompilerParams(
                dimension_semantics=(
                    ("arbitrary",) if overlap_w2 else ("parallel",)),
                vmem_limit_bytes=vmem_limit,
            ),
            cost_estimate=cost,
        )

    args = (t2, freqs, w1m, b1r, w2m, b2r)
    try:
        out = build(True)(*args)
    except Exception:
        # Fallback if pipeline_mode=pl.Buffered(1) is not supported by the
        # installed Pallas build: default double-buffered resident weights.
        out = build(False)(*args)

    return out[:N, :H]


# -----------------------------------------------------------------------------
# pure-JAX f32 reference matching the PyTorch module
# -----------------------------------------------------------------------------
def timestep_embedder_ref(t, params):
    F = params["w1"].shape[0]
    half = F // 2
    freqs = jnp.exp(-math.log(MAX_PERIOD) * jnp.arange(half, dtype=jnp.float32) / half)
    args = t[:, None].astype(jnp.float32) * freqs[None]
    emb = jnp.concatenate([jnp.cos(args), jnp.sin(args)], axis=-1)
    if F % 2:
        emb = jnp.concatenate([emb, jnp.zeros_like(emb[:, :1])], axis=-1)
    h = emb @ params["w1"] + params["b1"]
    h = h * jax.nn.sigmoid(h)
    return h @ params["w2"] + params["b2"]


def init_params(key, freq_dim, hidden):
    ks = jax.random.split(key, 4)
    s1 = 1.0 / math.sqrt(freq_dim)
    s2 = 1.0 / math.sqrt(hidden)
    # nn.Linear stores weight (out, in); we keep the transposed (in, out)
    # layout so the kernel computes h @ W directly.
    return {
        "w1": jax.random.uniform(ks[0], (freq_dim, hidden), jnp.float32, -s1, s1),
        "b1": jax.random.uniform(ks[1], (hidden,), jnp.float32, -s1, s1),
        "w2": jax.random.uniform(ks[2], (hidden, hidden), jnp.float32, -s2, s2),
        "b2": jax.random.uniform(ks[3], (hidden,), jnp.float32, -s2, s2),
    }


if __name__ == "__main__":
    key = jax.random.PRNGKey(0)

    def check(n, freq, hidden, tag):
        kt, kp = jax.random.split(jax.random.fold_in(key, tag))
        t = jax.random.uniform(kt, (n,), jnp.float32, 0.0, 1000.0)
        params = init_params(kp, freq, hidden)
        out = jax.block_until_ready(timestep_embedder(t, params))
        ref = timestep_embedder_ref(t, params)
        assert out.shape == (n, hidden), (out.shape, (n, hidden))
        err = float(jnp.max(jnp.abs(out - ref)))
        # bf16 MXU operands with f32 accumulation -> loosened tolerance vs f32.
        assert err < 5e-2, f"mismatch vs reference: {err} (N={n}, F={freq}, H={hidden})"

    # single-tile path (weight-fetch-bound regime: manual w2 DMA overlap)
    check(8, 256, 128, 0)
    # multi-tile path (balanced row tiles, megacore-parallel batch axis)
    check(520, 256, 128, 1)
    # non-128-aligned hidden / half -> wrapper lane-padding path
    check(5, 200, 120, 2)

    print("KERNEL_OK")
</pallas_src>

<mosaic_0001>
module attributes {stable_mosaic.version = 11 : i64} {
  func.func @_kernel_overlap(%arg0: i32, %arg1: memref<8x1xf32, #tpu.memory_space<vmem>>, %arg2: memref<1x128xf32, #tpu.memory_space<vmem>>, %arg3: memref<256x128xbf16, #tpu.memory_space<vmem>>, %arg4: memref<1x128xf32, #tpu.memory_space<vmem>>, %arg5: memref<128x128xbf16, #tpu.memory_space<any>>, %arg6: memref<1x128xf32, #tpu.memory_space<vmem>>, %arg7: memref<8x128xf32, #tpu.memory_space<vmem>>, %arg8: memref<128x128xbf16, #tpu.memory_space<vmem>>, %arg9: memref<!tpu.dma_semaphore, #tpu.memory_space<semaphore_mem>>) attributes {dimension_semantics = [#tpu.dimension_semantics<arbitrary>], iteration_bounds = array<i64: 1>, scalar_prefetch = 0 : i64, scratch_operands = 2 : i64, tpu.core_type = #tpu.core_type<tc>, window_params = [{transform_indices = @transform_0, window_bounds = array<i64: 8, 1>}, {pipeline_mode = #tpu.pipeline_mode<synchronous>, transform_indices = @transform_1, window_bounds = array<i64: 1, 128>}, {pipeline_mode = #tpu.pipeline_mode<synchronous>, transform_indices = @transform_2, window_bounds = array<i64: 256, 128>}, {pipeline_mode = #tpu.pipeline_mode<synchronous>, transform_indices = @transform_3, window_bounds = array<i64: 1, 128>}, {}, {pipeline_mode = #tpu.pipeline_mode<synchronous>, transform_indices = @transform_5, window_bounds = array<i64: 1, 128>}, {transform_indices = @transform_6, window_bounds = array<i64: 8, 128>}]} {
    tpu.enqueue_dma source(%arg5 : memref<128x128xbf16, #tpu.memory_space<any>>) target(%arg8 : memref<128x128xbf16, #tpu.memory_space<vmem>>) target_semaphore(%arg9 : memref<!tpu.dma_semaphore, #tpu.memory_space<semaphore_mem>>)
    %c0 = arith.constant 0 : index
    %c0_0 = arith.constant 0 : index
    %0 = vector.load %arg1[%c0, %c0_0] : memref<8x1xf32, #tpu.memory_space<vmem>>, vector<8x1xf32>
    %c0_1 = arith.constant 0 : index
    %c0_2 = arith.constant 0 : index
    %1 = vector.load %arg2[%c0_1, %c0_2] : memref<1x128xf32, #tpu.memory_space<vmem>>, vector<1x128xf32>
    %c0_3 = arith.constant 0 : index
    %c0_4 = arith.constant 0 : index
    %2 = vector.load %arg3[%c0_3, %c0_4] : memref<256x128xbf16, #tpu.memory_space<vmem>>, vector<256x128xbf16>
    %3 = vector.broadcast %0 : vector<8x1xf32> to vector<8x128xf32>
    %4 = vector.broadcast %1 : vector<1x128xf32> to vector<8x128xf32>
    %5 = arith.mulf %3, %4 : vector<8x128xf32>
    %6 = math.cos %5 : vector<8x128xf32>
    %7 = arith.truncf %6 : vector<8x128xf32> to vector<8x128xbf16>
    %8 = math.sin %5 : vector<8x128xf32>
    %9 = arith.truncf %8 : vector<8x128xf32> to vector<8x128xbf16>
    %10 = tpu.concatenate %7, %9 in 1 : vector<8x128xbf16>, vector<8x128xbf16> -> vector<8x256xbf16>
    %cst = arith.constant dense<0.000000e+00> : vector<8x128xf32>
    %11 = tpu.matmul %10, %2, %cst {dimension_numbers = #tpu.dot_dimension_numbers<[1], [0], [0], [1], [0, 0, 1, 1], [], []>} : vector<8x256xbf16>, vector<256x128xbf16>, vector<8x128xf32> -> vector<8x128xf32>
    %c0_5 = arith.constant 0 : index
    %c0_6 = arith.constant 0 : index
    %12 = vector.load %arg4[%c0_5, %c0_6] : memref<1x128xf32, #tpu.memory_space<vmem>>, vector<1x128xf32>
    %13 = vector.broadcast %12 : vector<1x128xf32> to vector<8x128xf32>
    %14 = arith.addf %11, %13 : vector<8x128xf32>
    %15 = arith.negf %14 : vector<8x128xf32>
    %16 = math.exp %15 : vector<8x128xf32>
    %cst_7 = arith.constant 1.000000e+00 : f32
    %17 = vector.broadcast %cst_7 : f32 to vector<8x128xf32>
    %18 = arith.addf %17, %16 : vector<8x128xf32>
    %19 = arith.divf %17, %18 : vector<8x128xf32>
    %20 = arith.mulf %14, %19 : vector<8x128xf32>
    tpu.wait_dma2 semaphore(%arg9 : memref<!tpu.dma_semaphore, #tpu.memory_space<semaphore_mem>>) src(%arg5 : memref<128x128xbf16, #tpu.memory_space<any>>) dst(%arg8 : memref<128x128xbf16, #tpu.memory_space<vmem>>)
    %c0_8 = arith.constant 0 : index
    %c0_9 = arith.constant 0 : index
    %21 = vector.load %arg8[%c0_8, %c0_9] : memref<128x128xbf16, #tpu.memory_space<vmem>>, vector<128x128xbf16>
    %22 = arith.truncf %20 : vector<8x128xf32> to vector<8x128xbf16>
    %cst_10 = arith.constant dense<0.000000e+00> : vector<8x128xf32>
    %23 = tpu.matmul %22, %21, %cst_10 {dimension_numbers = #tpu.dot_dimension_numbers<[1], [0], [0], [1], [0, 0, 1, 1], [], []>} : vector<8x128xbf16>, vector<128x128xbf16>, vector<8x128xf32> -> vector<8x128xf32>
    %c0_11 = arith.constant 0 : index
    %c0_12 = arith.constant 0 : index
    %24 = vector.load %arg6[%c0_11, %c0_12] : memref<1x128xf32, #tpu.memory_space<vmem>>, vector<1x128xf32>
    %25 = vector.broadcast %24 : vector<1x128xf32> to vector<8x128xf32>
    %26 = arith.addf %23, %25 : vector<8x128xf32>
    %c0_13 = arith.constant 0 : index
    %c0_14 = arith.constant 0 : index
    %27 = vector.load %arg7[%c0_13, %c0_14] : memref<8x128xf32, #tpu.memory_space<vmem>>, vector<8x128xf32>
    tpu.vector_store %arg7[%c0_13, %c0_14], %26 {strides = array<i32>} : memref<8x128xf32, #tpu.memory_space<vmem>>, vector<8x128xf32>,
    return
  }
  func.func @transform_0(%arg0: i32) -> (i32, i32) {
    %c0_i32 = arith.constant 0 : i32
    %c0_i32_0 = arith.constant 0 : i32
    return %arg0, %c0_i32 : i32, i32
  }
  func.func @transform_1(%arg0: i32) -> (i32, i32) {
    %c0_i32 = arith.constant 0 : i32
    %c0_i32_0 = arith.constant 0 : i32
    %c0_i32_1 = arith.constant 0 : i32
    return %c0_i32, %c0_i32_0 : i32, i32
  }
  func.func @transform_2(%arg0: i32) -> (i32, i32) {
    %c0_i32 = arith.constant 0 : i32
    %c0_i32_0 = arith.constant 0 : i32
    %c0_i32_1 = arith.constant 0 : i32
    return %c0_i32, %c0_i32_0 : i32, i32
  }
  func.func @transform_3(%arg0: i32) -> (i32, i32) {
    %c0_i32 = arith.constant 0 : i32
    %c0_i32_0 = arith.constant 0 : i32
    %c0_i32_1 = arith.constant 0 : i32
    return %c0_i32, %c0_i32_0 : i32, i32
  }
  func.func @transform_5(%arg0: i32) -> (i32, i32) {
    %c0_i32 = arith.constant 0 : i32
    %c0_i32_0 = arith.constant 0 : i32
    %c0_i32_1 = arith.constant 0 : i32
    return %c0_i32, %c0_i32_0 : i32, i32
  }
  func.func @transform_6(%arg0: i32) -> (i32, i32) {
    %c0_i32 = arith.constant 0 : i32
    %c0_i32_0 = arith.constant 0 : i32
    return %arg0, %c0_i32 : i32, i32
  }
}

module attributes {stable_mosaic.version = 11 : i64} {
  func.func @_kernel_overlap(%arg0: i32, %arg1: memref<8x1xf32, #tpu.memory_space<vmem>>, %arg2: memref<1x128xf32, #tpu.memory_space<vmem>>, %arg3: memref<256x128xbf16, #tpu.memory_space<vmem>>, %arg4: memref<1x128xf32, #tpu.memory_space<vmem>>, %arg5: memref<128x128xbf16, #tpu.memory_space<any>>, %arg6: memref<1x128xf32, #tpu.memory_space<vmem>>, %arg7: memref<8x128xf32, #tpu.memory_space<vmem>>, %arg8: memref<128x128xbf16, #tpu.memory_space<vmem>>, %arg9: memref<!tpu.dma_semaphore, #tpu.memory_space<semaphore_mem>>) attributes {dimension_semantics = [#tpu.dimension_semantics<arbitrary>], iteration_bounds = array<i64: 1>, scalar_prefetch = 0 : i64, scratch_operands = 2 : i64, tpu.core_type = #tpu.core_type<tc>, window_params = [{transform_indices = @transform_0, window_bounds = array<i64: 8, 1>}, {pipeline_mode = #tpu.pipeline_mode<synchronous>, transform_indices = @transform_1, window_bounds = array<i64: 1, 128>}, {pipeline_mode = #tpu.pipeline_mode<synchronous>, transform_indices = @transform_2, window_bounds = array<i64: 256, 128>}, {pipeline_mode = #tpu.pipeline_mode<synchronous>, transform_indices = @transform_3, window_bounds = array<i64: 1, 128>}, {}, {pipeline_mode = #tpu.pipeline_mode<synchronous>, transform_indices = @transform_5, window_bounds = array<i64: 1, 128>}, {transform_indices = @transform_6, window_bounds = array<i64: 8, 128>}]} {
    tpu.enqueue_dma source(%arg5 : memref<128x128xbf16, #tpu.memory_space<any>>) target(%arg8 : memref<128x128xbf16, #tpu.memory_space<vmem>>) target_semaphore(%arg9 : memref<!tpu.dma_semaphore, #tpu.memory_space<semaphore_mem>>)
    %c0 = arith.constant 0 : index
    %c0_0 = arith.constant 0 : index
    %0 = vector.load %arg1[%c0, %c0_0] : memref<8x1xf32, #tpu.memory_space<vmem>>, vector<8x1xf32>
    %c0_1 = arith.constant 0 : index
    %c0_2 = arith.constant 0 : index
    %1 = vector.load %arg2[%c0_1, %c0_2] : memref<1x128xf32, #tpu.memory_space<vmem>>, vector<1x128xf32>
    %c0_3 = arith.constant 0 : index
    %c0_4 = arith.constant 0 : index
    %2 = vector.load %arg3[%c0_3, %c0_4] : memref<256x128xbf16, #tpu.memory_space<vmem>>, vector<256x128xbf16>
    %3 = vector.broadcast %0 : vector<8x1xf32> to vector<8x128xf32>
    %4 = vector.broadcast %1 : vector<1x128xf32> to vector<8x128xf32>
    %5 = arith.mulf %3, %4 : vector<8x128xf32>
    %6 = math.cos %5 : vector<8x128xf32>
    %7 = arith.truncf %6 : vector<8x128xf32> to vector<8x128xbf16>
    %8 = math.sin %5 : vector<8x128xf32>
    %9 = arith.truncf %8 : vector<8x128xf32> to vector<8x128xbf16>
    %10 = tpu.concatenate %7, %9 in 1 : vector<8x128xbf16>, vector<8x128xbf16> -> vector<8x256xbf16>
    %cst = arith.constant dense<0.000000e+00> : vector<8x128xf32>
    %11 = tpu.matmul %10, %2, %cst {dimension_numbers = #tpu.dot_dimension_numbers<[1], [0], [0], [1], [0, 0, 1, 1], [], []>} : vector<8x256xbf16>, vector<256x128xbf16>, vector<8x128xf32> -> vector<8x128xf32>
    %c0_5 = arith.constant 0 : index
    %c0_6 = arith.constant 0 : index
    %12 = vector.load %arg4[%c0_5, %c0_6] : memref<1x128xf32, #tpu.memory_space<vmem>>, vector<1x128xf32>
    %13 = vector.broadcast %12 : vector<1x128xf32> to vector<8x128xf32>
    %14 = arith.addf %11, %13 : vector<8x128xf32>
    %15 = arith.negf %14 : vector<8x128xf32>
    %16 = math.exp %15 : vector<8x128xf32>
    %cst_7 = arith.constant 1.000000e+00 : f32
    %17 = vector.broadcast %cst_7 : f32 to vector<8x128xf32>
    %18 = arith.addf %17, %16 : vector<8x128xf32>
    %19 = arith.divf %17, %18 : vector<8x128xf32>
    %20 = arith.mulf %14, %19 : vector<8x128xf32>
    tpu.wait_dma2 semaphore(%arg9 : memref<!tpu.dma_semaphore, #tpu.memory_space<semaphore_mem>>) src(%arg5 : memref<128x128xbf16, #tpu.memory_space<any>>) dst(%arg8 : memref<128x128xbf16, #tpu.memory_space<vmem>>)
    %c0_8 = arith.constant 0 : index
    %c0_9 = arith.constant 0 : index
    %21 = vector.load %arg8[%c0_8, %c0_9] : memref<128x128xbf16, #tpu.memory_space<vmem>>, vector<128x128xbf16>
    %22 = arith.truncf %20 : vector<8x128xf32> to vector<8x128xbf16>
    %cst_10 = arith.constant dense<0.000000e+00> : vector<8x128xf32>
    %23 = tpu.matmul %22, %21, %cst_10 {dimension_numbers = #tpu.dot_dimension_numbers<[1], [0], [0], [1], [0, 0, 1, 1], [], []>} : vector<8x128xbf16>, vector<128x128xbf16>, vector<8x128xf32> -> vector<8x128xf32>
    %c0_11 = arith.constant 0 : index
    %c0_12 = arith.constant 0 : index
    %24 = vector.load %arg6[%c0_11, %c0_12] : memref<1x128xf32, #tpu.memory_space<vmem>>, vector<1x128xf32>
    %25 = vector.broadcast %24 : vector<1x128xf32> to vector<8x128xf32>
    %26 = arith.addf %23, %25 : vector<8x128xf32>
    %c0_13 = arith.constant 0 : index
    %c0_14 = arith.constant 0 : index
    %27 = vector.load %arg7[%c0_13, %c0_14] : memref<8x128xf32, #tpu.memory_space<vmem>>, vector<8x128xf32>
    tpu.vector_store %arg7[%c0_13, %c0_14], %26 {strides = array<i32>} : memref<8x128xf32, #tpu.memory_space<vmem>>, vector<8x128xf32>,
    return
  }
  func.func @transform_0(%arg0: i32) -> (i32, i32) {
    %c0_i32 = arith.constant 0 : i32
    %c0_i32_0 = arith.constant 0 : i32
    return %arg0, %c0_i32 : i32, i32
  }
  func.func @transform_1(%arg0: i32) -> (i32, i32) {
    %c0_i32 = arith.constant 0 : i32
    %c0_i32_0 = arith.constant 0 : i32
    %c0_i32_1 = arith.constant 0 : i32
    return %c0_i32, %c0_i32_0 : i32, i32
  }
  func.func @transform_2(%arg0: i32) -> (i32, i32) {
    %c0_i32 = arith.constant 0 : i32
    %c0_i32_0 = arith.constant 0 : i32
    %c0_i32_1 = arith.constant 0 : i32
    return %c0_i32, %c0_i32_0 : i32, i32
  }
  func.func @transform_3(%arg0: i32) -> (i32, i32) {
    %c0_i32 = arith.constant 0 : i32
    %c0_i32_0 = arith.constant 0 : i32
    %c0_i32_1 = arith.constant 0 : i32
    return %c0_i32, %c0_i32_0 : i32, i32
  }
  func.func @transform_5(%arg0: i32) -> (i32, i32) {
    %c0_i32 = arith.constant 0 : i32
    %c0_i32_0 = arith.constant 0 : i32
    %c0_i32_1 = arith.constant 0 : i32
    return %c0_i32, %c0_i32_0 : i32, i32
  }
  func.func @transform_6(%arg0: i32) -> (i32, i32) {
    %c0_i32 = arith.constant 0 : i32
    %c0_i32_0 = arith.constant 0 : i32
    return %arg0, %c0_i32 : i32, i32
  }
}

</mosaic_0001>

<llo_original>
// kernel: tpu_custom_call.1
$region0: #{tpu_custom_call.1}
  #allocation0 [shape = 'u32[]', space=smem, size = 0x4, offset = 0x4, fixed_abs, tag = 'smem constant byte address 0x4 - core index']
  #allocation1 [shape = 'u32[144,128]{1,0:T(1,128)}', space=vmem, size = 0x12000, scoped, tag = 'internal scratch']
  #allocation2 [shape = 'bf16[128,128]{1,0:T(8,128)(2,1)}', space=vmem, size = 0x8000, scoped, tag = 'scratch operand']
  #allocation3 [shape = 's32[1]{0}', space=sflag, size = 0x4, scoped, tag = 'scratch operand']
  #allocation8 [shape = 's32[]', space=sflag, size = 0x4, offset = 0, fixed_abs, tag = 'sflag constant byte address 0x0 - dummy sync flag']
  #allocation9 [shape = 's32[]', space=sflag, size = 0x4, offset = 0, fixed_abs, tag = 'sflag constant byte address 0x0 - dummy sync flag']
  #allocation10 [shape = 'u32[]', space=smem, size = 0x4, offset = 0x44, fixed_abs, tag = 'smem constant byte address 0x44 - assertion arg 0']
  #allocation11 [shape = 'u32[]', space=smem, size = 0x4, offset = 0x48, fixed_abs, tag = 'smem constant byte address 0x48 - assertion arg 1']
  %s0 = inlined_call_operand.vmem [shape: f32[8,1], index: 0, kind: input, shape index: {}]
  %s1 = inlined_call_operand.vmem [shape: f32[1,128], index: 1, kind: input, shape index: {}]
  %s2 = inlined_call_operand.hbm [shape: bf16[256,128], index: 2, kind: input, shape index: {}]
  %s3 = inlined_call_operand.vmem [shape: f32[1,128], index: 3, kind: input, shape index: {}]
  %s4 = inlined_call_operand.hbm [shape: bf16[128,128], index: 4, kind: input, shape index: {}]
  %s5 = inlined_call_operand.vmem [shape: f32[1,128], index: 5, kind: input, shape index: {}]
  %s6 = inlined_call_operand.hbm [shape: f32[8,128], index: 6, kind: output, shape index: {}]
  %s7 = sld [smem:[#allocation0]]
  $region38: #{tpu_custom_call.1} parent=0
    _
  %s9 = ssub.s32 1, %s7
  %s10 = scalar_select 0, %s9, %s7
  $region1: #{tpu_custom_call.1} parent=0
    #allocation4 [shape = 'u8[65536]{0}', space=vmem, size = 0x10000, scoped, tag = 'input window, operand 2, single buffered']
    #allocation5 [shape = 's32[1]{0}', space=sflag, size = 0x4, scoped, tag = 'scoped memory for tpu_custom_call.1']
    #allocation6 [shape = 's32[1]{0}', space=sflag, size = 0x4, scoped, tag = 'scoped memory for tpu_custom_call.1']
    #allocation7 [shape = 'u8[4096]{0}', space=vmem, size = 0x1000, scoped, tag = 'output window, operand 0, single buffered']
    %11 = vsyncpa [#allocation5], 0
    %12 = vsyncpa [#allocation6], 0
    // Predicated region
    $region2: #{tpu_custom_call.1} parent=1 // pred_check
      _
    $region3: #{tpu_custom_call.1} parent=1 // pred_check_branch
      %14 = sbr.rel (0) target = $region5
    $region4: #{tpu_custom_call.1} parent=1 // pred_region
      _
    $region5: #{tpu_custom_call.1} parent=1 // pred_fallthru
      _
    // Predicated region
    $region6: #{tpu_custom_call.1} parent=1 // pred_check
      _
    $region7: #{tpu_custom_call.1} parent=1 // pred_check_branch
      %16 = sbr.rel (0) target = $region9
    $region8: #{tpu_custom_call.1} parent=1 // pred_region
      _
    $region9: #{tpu_custom_call.1} parent=1 // pred_fallthru
      _
    // Predicated region
    $region10: #{tpu_custom_call.1} parent=1 // pred_check
      _
    $region11: #{tpu_custom_call.1} parent=1 // pred_check_branch
      %18 = sbr.rel (0) target = $region13
    $region12: #{tpu_custom_call.1} parent=1 // pred_region
      %s20 = ssub.s32 2048, 2048
      %21 = vsyncadd [#allocation5], %s20
      %s22 = sshll.u32 [#allocation4], 4
      %s23 = int_to_ptr.vmem [resolvable:$true] %s22
      %28 = dma.hbm_to_vmem [thread:$0]  %s2, 2048, %s23, [#allocation5], 64, 64, 4
    $region13: #{tpu_custom_call.1} parent=1 // pred_fallthru
      _
    // Predicated region
    $region14: #{tpu_custom_call.1} parent=1 // pred_check
      _
    $region15: #{tpu_custom_call.1} parent=1 // pred_check_branch
      %30 = sbr.rel (0) target = $region17
    $region16: #{tpu_custom_call.1} parent=1 // pred_region
      _
    $region17: #{tpu_custom_call.1} parent=1 // pred_fallthru
      _
    // Predicated region
    $region18: #{tpu_custom_call.1} parent=1 // pred_check
      _
    $region19: #{tpu_custom_call.1} parent=1 // pred_check_branch
      %32 = sbr.rel (0) target = $region21
    $region20: #{tpu_custom_call.1} parent=1 // pred_region
      _
    $region21: #{tpu_custom_call.1} parent=1 // pred_fallthru
      _
    // Predicated region
    $region22: #{tpu_custom_call.1} parent=1 // pred_check
      _
    $region23: #{tpu_custom_call.1} parent=1 // pred_check_branch
      %34 = sbr.rel (0) target = $region25
    $region24: #{tpu_custom_call.1} parent=1 // pred_region
      %35 = dma.done [#allocation5], 2048
    $region25: #{tpu_custom_call.1} parent=1 // pred_fallthru
      _
    // Predicated region
    $region26: #{tpu_custom_call.1} parent=1 // pred_check
      _
    $region27: #{tpu_custom_call.1} parent=1 // pred_check_branch
      %38 = sbr.rel target = $region29
    $region28: #{tpu_custom_call.1} parent=1 // pred_region
      %39 = sst [smem:[#allocation10]] [#allocation9]
      %40 = sst [smem:[#allocation11]] [#allocation8]
    $region29: #{tpu_custom_call.1} parent=1 // pred_fallthru
      _
    %42 = shalt.err (0)
    %s44 = sshll.u32 [#allocation2], 4
    %s45 = int_to_ptr.vmem [resolvable:$true] %s44
    %47 = dma.hbm_to_vmem [thread:$0]  %s4, 1024, %s45, [#allocation3]
    %v48 = vld [vmem:[%s0] sm:$0xff]
    %v49 = vld [vmem:[%s1] sm:$0x1]
    %v50 = vld [vmem:[#allocation4] sm:$0xf]
    %v51 = vld [vmem:[#allocation4 + $0x4] sm:$0xf]
    %v52 = vld [vmem:[#allocation4 + $0x8] sm:$0xf]
    %v53 = vld [vmem:[#allocation4 + $0xc] sm:$0xf]
    %v54 = vld [vmem:[#allocation4 + $0x10] sm:$0xf]
    %v55 = vld [vmem:[#allocation4 + $0x14] sm:$0xf]
    %v56 = vld [vmem:[#allocation4 + $0x18] sm:$0xf]
    %v57 = vld [vmem:[#allocation4 + $0x1c] sm:$0xf]
    %v58 = vld [vmem:[#allocation4 + $0x20] sm:$0xf]
    %v59 = vld [vmem:[#allocation4 + $0x24] sm:$0xf]
    %v60 = vld [vmem:[#allocation4 + $0x28] sm:$0xf]
    %v61 = vld [vmem:[#allocation4 + $0x2c] sm:$0xf]
    %v62 = vld [vmem:[#allocation4 + $0x30] sm:$0xf]
    %v63 = vld [vmem:[#allocation4 + $0x34] sm:$0xf]
    %v64 = vld [vmem:[#allocation4 + $0x38] sm:$0xf]
    %v65 = vld [vmem:[#allocation4 + $0x3c] sm:$0xf]
    %v66 = vld [vmem:[#allocation4 + $0x40] sm:$0xf]
    %v67 = vld [vmem:[#allocation4 + $0x44] sm:$0xf]
    %v68 = vld [vmem:[#allocation4 + $0x48] sm:$0xf]
    %v69 = vld [vmem:[#allocation4 + $0x4c] sm:$0xf]
    %v70 = vld [vmem:[#allocation4 + $0x50] sm:$0xf]
    %v71 = vld [vmem:[#allocation4 + $0x54] sm:$0xf]
    %v72 = vld [vmem:[#allocation4 + $0x58] sm:$0xf]
    %v73 = vld [vmem:[#allocation4 + $0x5c] sm:$0xf]
    %v74 = vld [vmem:[#allocation4 + $0x60] sm:$0xf]
    %v75 = vld [vmem:[#allocation4 + $0x64] sm:$0xf]
    %v76 = vld [vmem:[#allocation4 + $0x68] sm:$0xf]
    %v77 = vld [vmem:[#allocation4 + $0x6c] sm:$0xf]
    %v78 = vld [vmem:[#allocation4 + $0x70] sm:$0xf]
    %v79 = vld [vmem:[#allocation4 + $0x74] sm:$0xf]
    %v80 = vld [vmem:[#allocation4 + $0x78] sm:$0xf]
    %v81 = vld [vmem:[#allocation4 + $0x7c] sm:$0xf]
    %83 = vset.pattern.permute.xlu0 0
    %84 = vperm.xlu0 %83, %v48
    %v85 = vpop.permute.xlu0 %84
    %v88 = vlaneseq
    %v89 = vshrl.u32 %v88, 7
    %v90 = vsub.s32 0, %v89
    %v91 = vrot.slane %v49, %v90
    %v93 = vmul.f32 %v85, %v91
    %v94 = vand.u32 2147483647, %v93
    %vm95 = vcmp.le.f32.partialorder %v94, 0.7853982
    %vm96 = vcmp.lt.s32.totalorder %v93, 0
    %v97 = vand.u32 %v93, 2139095040
    %v98 = vshrl.u32 %v97, 23
    %v99 = vsub.s32 %v98, 127
    %v100 = vand.u32 2147483647, %v93
    %v101 = vand.u32 %v100, 8388607
    %v102 = vor.u32 %v101, 8388608
    %v103 = vsub.s32 0, %v102
    %v104 = vadd.s32 %v99, 1
    %vm105 = vcmp.gt.s32.totalorder %v104, 0
    %v106 = vsel %vm105, %v104, 0
    %v107 = vshrl.u32 %v106, 5
    %v108 = vand.u32 %v106, 31
    %v109 = vsub.s32 32, %v108
    %v110 = vshrl.u32 683565275, %v109
    %v111 = vshll.u32 683565275, %v108
    %v112 = vshrl.u32 2475754826, %v109
    %v113 = vor.u32 %v111, %v112
    %v114 = vshll.u32 2475754826, %v108
    %v115 = vshrl.u32 2131351028, %v109
    %v116 = vor.u32 %v114, %v115
    %v117 = vshll.u32 2131351028, %v108
    %v118 = vshrl.u32 2102212464, %v109
    %v119 = vor.u32 %v117, %v118
    %v120 = vshll.u32 2102212464, %v108
    %v121 = vshrl.u32 920167782, %v109
    %v122 = vor.u32 %v120, %v121
    %v123 = vshll.u32 920167782, %v108
    %v124 = vshrl.u32 1326507024, %v109
    %v125 = vor.u32 %v123, %v124
    %vm126 = vcmp.lt.s32.totalorder %v107, 1
    %vm127 = vcmp.lt.s32.totalorder %v107, 2
    %vm128 = vcmp.lt.s32.totalorder %v107, 3
    %vm129 = vcmp.lt.s32.totalorder %v107, 4
    %v130 = vsel %vm126, %v110, %v113
    %v131 = vsel %vm129, %v119, 2102212464
    %v132 = vsel %vm128, %v116, %v131
    %v133 = vsel %vm127, %v130, %v132
    %v134 = vsel %vm126, %v113, %v116
    %v135 = vsel %vm129, %v122, 920167782
    %v136 = vsel %vm128, %v119, %v135
    %v137 = vsel %vm127, %v134, %v136
    %v138 = vsel %vm126, %v116, %v119
    %v139 = vsel %vm129, %v125, 1326507024
    %v140 = vsel %vm128, %v122, %v139
    %v141 = vsel %vm127, %v138, %v140
    %v142 = vshll.u32 %v102, 8
    %v143 = vmul.u32.u64.compose %v142, %v141
    %v144 = vextract.low.u32 %v143
    %v145 = vextract.high.u32 %v143
    %v146 = vmul.u32.u64.compose %v142, %v137
    %v147 = vextract.low.u32 %v146
    %v148 = vextract.high.u32 %v146
    %v149 = vmul.u32 %v142, %v133
    %v150 = vadd.s32 %v145, %v147
    %vm151 = vc.u32 %v145, %v147
    %v152 = vadd.s32 %v148, 1
    %v153 = vsel %vm151, %v152, %v148
    %v154 = vadd.s32 %v149, %v153
    %v155 = vadd.s32 %v154, 536870912
    %v156 = vshrl.u32 %v155, 30
    %v157 = vshll.u32 %v156, 30
    %v158 = vsub.s32 %v154, %v157
    %vm159 = vcmp.lt.s32.totalorder %v158, 0
    %v160 = vsub.s32 0, %v158
    %v161 = vsel %vm159, %v160, %v158
    %v162 = vclz %v161
    %v163 = vsub.s32 %v162, 2
    %vm164 = vcmp.gt.s32.totalorder 0, %v163
    %v165 = vsel %vm164, 0, %v163
    %v166 = vsub.s32 32, %v165
    %v167 = vshll.u32 %v158, %v165
    %v168 = vshrl.u32 %v150, %v166
    %v169 = vor.u32 %v167, %v168
    %v170 = vsub.s32 4294967266, %v165
    %v171 = vadd.s32 %v170, 127
    %v172 = vshll.u32 %v171, 23
    %v173 = vor.u32 4788187, %v172
    %v174 = vand.u32 2147483647, %v173
    %v176 = vcvt.s32.f32 %v169
    %v177 = vmul.f32 %v176, %v174
    %v178 = vxor.u32 %v177, 2147483648
    %v179 = vsel %vm96, %v178, %v177
    %v180 = vsub.s32 4, %v156
    %v181 = vsel %vm96, %v180, %v156
    %v182 = vsel %vm95, %v93, %v179
    %v183 = vsel %vm95, 0, %v181
    %v184 = vcosq.f32.pop %v182
    %v185 = vsinq.f32.pop %v182
    %vm186 = vweird.f32 %v93
    %v187 = vand.u32 %v183, 3
    %vm188 = vcmp.lt.s32.totalorder %v187, 2
    %vm189 = vcmp.eq.s32.totalorder %v187, 0
    %v190 = vxor.u32 %v185, 2147483648
    %v191 = vsel %vm189, %v184, %v190
    %vm192 = vcmp.eq.s32.totalorder %v187, 2
    %v193 = vxor.u32 %v184, 2147483648
    %v194 = vsel %vm192, %v193, %v185
    %v195 = vsel %vm188, %v191, %v194
    %v196 = vsel %vm186, nan, %v195
    %v197 = vpack.c.bf16 %v196, %v196
    %v198 = vand.u32 2147483647, %v93
    %vm199 = vcmp.le.f32.partialorder %v198, 0.7853982
    %vm200 = vcmp.lt.s32.totalorder %v93, 0
    %v201 = vand.u32 %v93, 2139095040
    %v202 = vshrl.u32 %v201, 23
    %v203 = vsub.s32 %v202, 127
    %v204 = vand.u32 2147483647, %v93
    %v205 = vand.u32 %v204, 8388607
    %v206 = vor.u32 %v205, 8388608
    %v207 = vsub.s32 0, %v206
    %v208 = vadd.s32 %v203, 1
    %vm209 = vcmp.gt.s32.totalorder %v208, 0
    %v210 = vsel %vm209, %v208, 0
    %v211 = vshrl.u32 %v210, 5
    %v212 = vand.u32 %v210, 31
    %v213 = vsub.s32 32, %v212
    %v214 = vshrl.u32 683565275, %v213
    %v215 = vshll.u32 683565275, %v212
    %v216 = vshrl.u32 2475754826, %v213
    %v217 = vor.u32 %v215, %v216
    %v218 = vshll.u32 2475754826, %v212
    %v219 = vshrl.u32 2131351028, %v213
    %v220 = vor.u32 %v218, %v219
    %v221 = vshll.u32 2131351028, %v212
    %v222 = vshrl.u32 2102212464, %v213
    %v223 = vor.u32 %v221, %v222
    %v224 = vshll.u32 2102212464, %v212
    %v225 = vshrl.u32 920167782, %v213
    %v226 = vor.u32 %v224, %v225
    %v227 = vshll.u32 920167782, %v212
    %v228 = vshrl.u32 1326507024, %v213
    %v229 = vor.u32 %v227, %v228
    %vm230 = vcmp.lt.s32.totalorder %v211, 1
    %vm231 = vcmp.lt.s32.totalorder %v211, 2
    %vm232 = vcmp.lt.s32.totalorder %v211, 3
    %vm233 = vcmp.lt.s32.totalorder %v211, 4
    %v234 = vsel %vm230, %v214, %v217
    %v235 = vsel %vm233, %v223, 2102212464
    %v236 = vsel %vm232, %v220, %v235
    %v237 = vsel %vm231, %v234, %v236
    %v238 = vsel %vm230, %v217, %v220
    %v239 = vsel %vm233, %v226, 920167782
    %v240 = vsel %vm232, %v223, %v239
    %v241 = vsel %vm231, %v238, %v240
    %v242 = vsel %vm230, %v220, %v223
    %v243 = vsel %vm233, %v229, 1326507024
    %v244 = vsel %vm232, %v226, %v243
    %v245 = vsel %vm231, %v242, %v244
    %v246 = vshll.u32 %v206, 8
    %v247 = vmul.u32.u64.compose %v246, %v245
    %v248 = vextract.low.u32 %v247
    %v249 = vextract.high.u32 %v247
    %v250 = vmul.u32.u64.compose %v246, %v241
    %v251 = vextract.low.u32 %v250
    %v252 = vextract.high.u32 %v250
    %v253 = vmul.u32 %v246, %v237
    %v254 = vadd.s32 %v249, %v251
    %vm255 = vc.u32 %v249, %v251
    %v256 = vadd.s32 %v252, 1
    %v257 = vsel %vm255, %v256, %v252
    %v258 = vadd.s32 %v253, %v257
    %v259 = vadd.s32 %v258, 536870912
    %v260 = vshrl.u32 %v259, 30
    %v261 = vshll.u32 %v260, 30
    %v262 = vsub.s32 %v258, %v261
    %vm263 = vcmp.lt.s32.totalorder %v262, 0
    %v264 = vsub.s32 0, %v262
    %v265 = vsel %vm263, %v264, %v262
    %v266 = vclz %v265
    %v267 = vsub.s32 %v266, 2
    %vm268 = vcmp.gt.s32.totalorder 0, %v267
    %v269 = vsel %vm268, 0, %v267
    %v270 = vsub.s32 32, %v269
    %v271 = vshll.u32 %v262, %v269
    %v272 = vshrl.u32 %v254, %v270
    %v273 = vor.u32 %v271, %v272
    %v274 = vsub.s32 4294967266, %v269
    %v275 = vadd.s32 %v274, 127
    %v276 = vshll.u32 %v275, 23
    %v277 = vor.u32 4788187, %v276
    %v278 = vand.u32 2147483647, %v277
    %v280 = vcvt.s32.f32 %v273
    %v281 = vmul.f32 %v280, %v278
    %v282 = vxor.u32 %v281, 2147483648
    %v283 = vsel %vm200, %v282, %v281
    %v284 = vsub.s32 4, %v260
    %v285 = vsel %vm200, %v284, %v260
    %v286 = vsel %vm199, %v93, %v283
    %v287 = vsel %vm199, 0, %v285
    %v288 = vcosq.f32.pop %v286
    %v289 = vsinq.f32.pop %v286
    %vm290 = vweird.f32 %v93
    %v291 = vadd.s32 %v287, 3
    %v292 = vand.u32 %v291, 3
    %vm293 = vcmp.lt.s32.totalorder %v292, 2
    %vm294 = vcmp.eq.s32.totalorder %v292, 0
    %v295 = vxor.u32 %v289, 2147483648
    %v296 = vsel %vm294, %v288, %v295
    %vm297 = vcmp.eq.s32.totalorder %v292, 2
    %v298 = vxor.u32 %v288, 2147483648
    %v299 = vsel %vm297, %v298, %v289
    %v300 = vsel %vm293, %v296, %v299
    %v301 = vsel %vm290, nan, %v300
    %v302 = vpack.c.bf16 %v301, %v301
    %v303 = vld [vmem:[%s3] sm:$0x1]
    %v305 = vlaneseq
    %v306 = vshrl.u32 %v305, 7
    %v307 = vsub.s32 0, %v306
    %v308 = vrot.slane %v303, %v307
    %v342 = vunpack.c.l.b16 %v50
    %v343 = vunpack.c.l.b16 %v51
    %v344 = vunpack.c.l.b16 %v52
    %v345 = vunpack.c.l.b16 %v53
    %v346 = vunpack.c.l.b16 %v54
    %v347 = vunpack.c.l.b16 %v55
    %v348 = vunpack.c.l.b16 %v56
    %v349 = vunpack.c.l.b16 %v57
    %v350 = vunpack.c.l.b16 %v58
    %v351 = vunpack.c.l.b16 %v59
    %v352 = vunpack.c.l.b16 %v60
    %v353 = vunpack.c.l.b16 %v61
    %v354 = vunpack.c.l.b16 %v62
    %v355 = vunpack.c.l.b16 %v63
    %v356 = vunpack.c.l.b16 %v64
    %v357 = vunpack.c.l.b16 %v65
    %v358 = vunpack.c.l.b16 %v66
    %v359 = vunpack.c.l.b16 %v67
    %v360 = vunpack.c.l.b16 %v68
    %v361 = vunpack.c.l.b16 %v69
    %v362 = vunpack.c.l.b16 %v70
    %v363 = vunpack.c.l.b16 %v71
    %v364 = vunpack.c.l.b16 %v72
    %v365 = vunpack.c.l.b16 %v73
    %v366 = vunpack.c.l.b16 %v74
    %v367 = vunpack.c.l.b16 %v75
    %v368 = vunpack.c.l.b16 %v76
    %v369 = vunpack.c.l.b16 %v77
    %v370 = vunpack.c.l.b16 %v78
    %v371 = vunpack.c.l.b16 %v79
    %v372 = vunpack.c.l.b16 %v80
    %v373 = vunpack.c.l.b16 %v81
    %v374 = vpack.c.b16 %v343, %v342
    %v375 = vpack.c.b16 %v345, %v344
    %v376 = vpack.c.b16 %v347, %v346
    %v377 = vpack.c.b16 %v349, %v348
    %v378 = vpack.c.b16 %v351, %v350
    %v379 = vpack.c.b16 %v353, %v352
    %v380 = vpack.c.b16 %v355, %v354
    %v381 = vpack.c.b16 %v357, %v356
    %v382 = vpack.c.b16 %v359, %v358
    %v383 = vpack.c.b16 %v361, %v360
    %v384 = vpack.c.b16 %v363, %v362
    %v385 = vpack.c.b16 %v365, %v364
    %v386 = vpack.c.b16 %v367, %v366
    %v387 = vpack.c.b16 %v369, %v368
    %v388 = vpack.c.b16 %v371, %v370
    %v389 = vpack.c.b16 %v373, %v372
    %406 = vmatprep.subr.bf16.mxu0 0
    %407 = vmatpush1.bf16.msra.mxu0 %v381
    %408 = vmatprep.subr.bf16.mxu0 0
    %409 = vmatpush1.bf16.msra.mxu0 %v380
    %410 = vmatprep.subr.bf16.mxu0 0
    %411 = vmatpush1.bf16.msra.mxu0 %v379
    %412 = vmatprep.subr.bf16.mxu0 0
    %413 = vmatpush1.bf16.msra.mxu0 %v378
    %414 = vmatprep.subr.bf16.mxu0 0
    %415 = vmatpush1.bf16.msra.mxu0 %v377
    %416 = vmatprep.subr.bf16.mxu0 0
    %417 = vmatpush1.bf16.msra.mxu0 %v376
    %418 = vmatprep.subr.bf16.mxu0 0
    %419 = vmatpush1.bf16.msra.mxu0 %v375
    %420 = vmatprep.subr.bf16.mxu0 0
    %421 = vmatpush1.bf16.msra.mxu0 %v374
    %422 = vmatprep.subr.bf16.mxu0 0
    %423 = vmatpush2.bf16.msra.mxu0 %v389
    %424 = vmatprep.subr.bf16.mxu0 0
    %425 = vmatpush2.bf16.msra.mxu0 %v388
    %426 = vmatprep.subr.bf16.mxu0 0
    %427 = vmatpush2.bf16.msra.mxu0 %v387
    %428 = vmatprep.subr.bf16.mxu0 0
    %429 = vmatpush2.bf16.msra.mxu0 %v386
    %430 = vmatprep.subr.bf16.mxu0 0
    %431 = vmatpush2.bf16.msra.mxu0 %v385
    %432 = vmatprep.subr.bf16.mxu0 0
    %433 = vmatpush2.bf16.msra.mxu0 %v384
    %434 = vmatprep.subr.bf16.mxu0 0
    %435 = vmatpush2.bf16.msra.mxu0 %v383
    %436 = vmatprep.subr.bf16.mxu0 0
    %437 = vmatpush2.bf16.msra.mxu0 %v382
    %438 = vmatprep.mubr.bf16.mxu0 %v302
    %439 = vmatmul.mubr.bf16.gmra.mxu0 %v197
    %v440 = vpop.f32.mrf.mxu0
    %v441 = vadd.f32 %v308, %v440
    %v442 = vpop.f32.mrf.mxu0
    %v443 = vpop.f32.mrf.mxu0
    %v444 = vpop.f32.mrf.mxu0
    %445 = vdwg.mxu0
    %v446 = vxor.u32 %v441, 2147483648
    %v447 = vmul.f32 %v446, 1.442695
    %v448 = vpow.pop %v447
    %v449 = vadd.f32 %v448, 1.0
    %v450 = vrcp.pop %v449
    %v451 = vmul.f32 1.0, %v450
    %v452 = vmul.f32 %v441, %v451
    %s453 = smul.u32 4, 16
    %s454 = smul.u32 %s453, 1
    %s455 = sshll.u32 %s454, 4
    %456 = dma.done [#allocation3], %s455
    %v457 = vld [vmem:[#allocation2] sm:$0xf]
    %v458 = vld [vmem:[#allocation2 + $0x4] sm:$0xf]
    %v459 = vld [vmem:[#allocation2 + $0x8] sm:$0xf]
    %v460 = vld [vmem:[#allocation2 + $0xc] sm:$0xf]
    %v461 = vld [vmem:[#allocation2 + $0x10] sm:$0xf]
    %v462 = vld [vmem:[#allocation2 + $0x14] sm:$0xf]
    %v463 = vld [vmem:[#allocation2 + $0x18] sm:$0xf]
    %v464 = vld [vmem:[#allocation2 + $0x1c] sm:$0xf]
    %v465 = vld [vmem:[#allocation2 + $0x20] sm:$0xf]
    %v466 = vld [vmem:[#allocation2 + $0x24] sm:$0xf]
    %v467 = vld [vmem:[#allocation2 + $0x28] sm:$0xf]
    %v468 = vld [vmem:[#allocation2 + $0x2c] sm:$0xf]
    %v469 = vld [vmem:[#allocation2 + $0x30] sm:$0xf]
    %v470 = vld [vmem:[#allocation2 + $0x34] sm:$0xf]
    %v471 = vld [vmem:[#allocation2 + $0x38] sm:$0xf]
    %v472 = vld [vmem:[#allocation2 + $0x3c] sm:$0xf]
    %v473 = vpack.c.bf16 %v452, %v452
    %v474 = vld [vmem:[%s5] sm:$0x1]
    %v476 = vlaneseq
    %v477 = vshrl.u32 %v476, 7
    %v478 = vsub.s32 0, %v477
    %v479 = vrot.slane %v474, %v478
    %v497 = vunpack.c.l.b16 %v457
    %v498 = vunpack.c.l.b16 %v458
    %v499 = vunpack.c.l.b16 %v459
    %v500 = vunpack.c.l.b16 %v460
    %v501 = vunpack.c.l.b16 %v461
    %v502 = vunpack.c.l.b16 %v462
    %v503 = vunpack.c.l.b16 %v463
    %v504 = vunpack.c.l.b16 %v464
    %v505 = vunpack.c.l.b16 %v465
    %v506 = vunpack.c.l.b16 %v466
    %v507 = vunpack.c.l.b16 %v467
    %v508 = vunpack.c.l.b16 %v468
    %v509 = vunpack.c.l.b16 %v469
    %v510 = vunpack.c.l.b16 %v470
    %v511 = vunpack.c.l.b16 %v471
    %v512 = vunpack.c.l.b16 %v472
    %v513 = vpack.c.b16 %v498, %v497
    %v514 = vpack.c.b16 %v500, %v499
    %v515 = vpack.c.b16 %v502, %v501
    %v516 = vpack.c.b16 %v504, %v503
    %v517 = vpack.c.b16 %v506, %v505
    %v518 = vpack.c.b16 %v508, %v507
    %v519 = vpack.c.b16 %v510, %v509
    %v520 = vpack.c.b16 %v512, %v511
    %529 = vmatprep.subr.bf16.mxu0 0
    %530 = vmatpush1.bf16.msra.mxu0 %v520
    %531 = vmatprep.subr.bf16.mxu0 0
    %532 = vmatpush1.bf16.msra.mxu0 %v519
    %533 = vmatprep.subr.bf16.mxu0 0
    %534 = vmatpush1.bf16.msra.mxu0 %v518
    %535 = vmatprep.subr.bf16.mxu0 0
    %536 = vmatpush1.bf16.msra.mxu0 %v517
    %537 = vmatprep.subr.bf16.mxu0 0
    %538 = vmatpush1.bf16.msra.mxu0 %v516
    %539 = vmatprep.subr.bf16.mxu0 0
    %540 = vmatpush1.bf16.msra.mxu0 %v515
    %541 = vmatprep.subr.bf16.mxu0 0
    %542 = vmatpush1.bf16.msra.mxu0 %v514
    %543 = vmatprep.subr.bf16.mxu0 0
    %544 = vmatpush1.bf16.msra.mxu0 %v513
    %545 = vmatprep.subr.bf16.mxu0 0
    %546 = vmatpush2.bf16.msra.mxu0 0
    %547 = vmatprep.subr.bf16.mxu0 0
    %548 = vmatpush2.bf16.msra.mxu0 0
    %549 = vmatprep.subr.bf16.mxu0 0
    %550 = vmatpush2.bf16.msra.mxu0 0
    %551 = vmatprep.subr.bf16.mxu0 0
    %552 = vmatpush2.bf16.msra.mxu0 0
    %553 = vmatprep.subr.bf16.mxu0 0
    %554 = vmatpush2.bf16.msra.mxu0 0
    %555 = vmatprep.subr.bf16.mxu0 0
    %556 = vmatpush2.bf16.msra.mxu0 0
    %557 = vmatprep.subr.bf16.mxu0 0
    %558 = vmatpush2.bf16.msra.mxu0 0
    %559 = vmatprep.subr.bf16.mxu0 0
    %560 = vmatpush2.bf16.msra.mxu0 0
    %561 = vmatprep.mubr.bf16.mxu0 0
    %562 = vmatmul.mubr.bf16.gmra.mxu0 %v473
    %v563 = vpop.f32.mrf.mxu0
    %v564 = vadd.f32 %v479, %v563
    %v565 = vpop.f32.mrf.mxu0
    %v566 = vpop.f32.mrf.mxu0
    %v567 = vpop.f32.mrf.mxu0
    %568 = vdwg.mxu0
    %569 = vst [vmem:[#allocation7] sm:$0xff] %v564
    // Predicated region
    $region30: #{tpu_custom_call.1} parent=1 // pred_check
      _
    $region31: #{tpu_custom_call.1} parent=1 // pred_check_branch
      %571 = sbr.rel (0) target = $region33
    $region32: #{tpu_custom_call.1} parent=1 // pred_region
      %s573 = ssub.s32 128, 128
      %574 = vsyncadd [#allocation6], %s573
      %s576 = sshll.u32 [#allocation7], 4
      %s577 = int_to_ptr.vmem [resolvable:$true] %s576
      %579 = dma.vmem_to_hbm [thread:$0]  %s577, 128, %s6, [#allocation6]
    $region33: #{tpu_custom_call.1} parent=1 // pred_fallthru
      _
    // Predicated region
    $region34: #{tpu_custom_call.1} parent=1 // pred_check
      _
    $region35: #{tpu_custom_call.1} parent=1 // pred_check_branch
      %581 = sbr.rel (0) target = $region37
    $region36: #{tpu_custom_call.1} parent=1 // pred_region
      %582 = dma.done [#allocation6], 128
    $region37: #{tpu_custom_call.1} parent=1 // pred_fallthru
      _
    %583 = vsyncpa [#allocation5], 1
    %584 = vsyncpa [#allocation6], 1
  %585 = vsyncmov [#allocation3]
  %s586 = vpop.sfrf %585
  %p587 = scmp.eq.s32.totalorder %s586, 0
  %p588 = pneg %p587
  %590 = shalt.err (%p588)

// kernel: tpu_custom_call.1
$region0: #{tpu_custom_call.1}
  #allocation0 [shape = 'u32[]', space=smem, size = 0x4, offset = 0x4, fixed_abs, tag = 'smem constant byte address 0x4 - core index']
  #allocation1 [shape = 'u32[144,128]{1,0:T(1,128)}', space=vmem, size = 0x12000, scoped, tag = 'internal scratch']
  #allocation2 [shape = 'bf16[128,128]{1,0:T(8,128)(2,1)}', space=vmem, size = 0x8000, scoped, tag = 'scratch operand']
  #allocation3 [shape = 's32[1]{0}', space=sflag, size = 0x4, scoped, tag = 'scratch operand']
  #allocation8 [shape = 's32[]', space=sflag, size = 0x4, offset = 0, fixed_abs, tag = 'sflag constant byte address 0x0 - dummy sync flag']
  #allocation9 [shape = 's32[]', space=sflag, size = 0x4, offset = 0, fixed_abs, tag = 'sflag constant byte address 0x0 - dummy sync flag']
  #allocation10 [shape = 'u32[]', space=smem, size = 0x4, offset = 0x44, fixed_abs, tag = 'smem constant byte address 0x44 - assertion arg 0']
  #allocation11 [shape = 'u32[]', space=smem, size = 0x4, offset = 0x48, fixed_abs, tag = 'smem constant byte address 0x48 - assertion arg 1']
  %s0 = inlined_call_operand.vmem [shape: f32[8,1], index: 0, kind: input, shape index: {}]
  %s1 = inlined_call_operand.vmem [shape: f32[1,128], index: 1, kind: input, shape index: {}]
  %s2 = inlined_call_operand.hbm [shape: bf16[256,128], index: 2, kind: input, shape index: {}]
  %s3 = inlined_call_operand.vmem [shape: f32[1,128], index: 3, kind: input, shape index: {}]
  %s4 = inlined_call_operand.hbm [shape: bf16[128,128], index: 4, kind: input, shape index: {}]
  %s5 = inlined_call_operand.vmem [shape: f32[1,128], index: 5, kind: input, shape index: {}]
  %s6 = inlined_call_operand.hbm [shape: f32[8,128], index: 6, kind: output, shape index: {}]
  %s7 = sld [smem:[#allocation0]]
  $region38: #{tpu_custom_call.1} parent=0
    _
  %s9 = ssub.s32 1, %s7
  %s10 = scalar_select 0, %s9, %s7
  $region1: #{tpu_custom_call.1} parent=0
    #allocation4 [shape = 'u8[65536]{0}', space=vmem, size = 0x10000, scoped, tag = 'input window, operand 2, single buffered']
    #allocation5 [shape = 's32[1]{0}', space=sflag, size = 0x4, scoped, tag = 'scoped memory for tpu_custom_call.1']
    #allocation6 [shape = 's32[1]{0}', space=sflag, size = 0x4, scoped, tag = 'scoped memory for tpu_custom_call.1']
    #allocation7 [shape = 'u8[4096]{0}', space=vmem, size = 0x1000, scoped, tag = 'output window, operand 0, single buffered']
    %11 = vsyncpa [#allocation5], 0
    %12 = vsyncpa [#allocation6], 0
    // Predicated region
    $region2: #{tpu_custom_call.1} parent=1 // pred_check
      _
    $region3: #{tpu_custom_call.1} parent=1 // pred_check_branch
      %14 = sbr.rel (0) target = $region5
    $region4: #{tpu_custom_call.1} parent=1 // pred_region
      _
    $region5: #{tpu_custom_call.1} parent=1 // pred_fallthru
      _
    // Predicated region
    $region6: #{tpu_custom_call.1} parent=1 // pred_check
      _
    $region7: #{tpu_custom_call.1} parent=1 // pred_check_branch
      %16 = sbr.rel (0) target = $region9
    $region8: #{tpu_custom_call.1} parent=1 // pred_region
      _
    $region9: #{tpu_custom_call.1} parent=1 // pred_fallthru
      _
    // Predicated region
    $region10: #{tpu_custom_call.1} parent=1 // pred_check
      _
    $region11: #{tpu_custom_call.1} parent=1 // pred_check_branch
      %18 = sbr.rel (0) target = $region13
    $region12: #{tpu_custom_call.1} parent=1 // pred_region
      %s20 = ssub.s32 2048, 2048
      %21 = vsyncadd [#allocation5], %s20
      %s22 = sshll.u32 [#allocation4], 4
      %s23 = int_to_ptr.vmem [resolvable:$true] %s22
      %28 = dma.hbm_to_vmem [thread:$0]  %s2, 2048, %s23, [#allocation5], 64, 64, 4
    $region13: #{tpu_custom_call.1} parent=1 // pred_fallthru
      _
    // Predicated region
    $region14: #{tpu_custom_call.1} parent=1 // pred_check
      _
    $region15: #{tpu_custom_call.1} parent=1 // pred_check_branch
      %30 = sbr.rel (0) target = $region17
    $region16: #{tpu_custom_call.1} parent=1 // pred_region
      _
    $region17: #{tpu_custom_call.1} parent=1 // pred_fallthru
      _
    // Predicated region
    $region18: #{tpu_custom_call.1} parent=1 // pred_check
      _
    $region19: #{tpu_custom_call.1} parent=1 // pred_check_branch
      %32 = sbr.rel (0) target = $region21
    $region20: #{tpu_custom_call.1} parent=1 // pred_region
      _
    $region21: #{tpu_custom_call.1} parent=1 // pred_fallthru
      _
    // Predicated region
    $region22: #{tpu_custom_call.1} parent=1 // pred_check
      _
    $region23: #{tpu_custom_call.1} parent=1 // pred_check_branch
      %34 = sbr.rel (0) target = $region25
    $region24: #{tpu_custom_call.1} parent=1 // pred_region
      %35 = dma.done [#allocation5], 2048
    $region25: #{tpu_custom_call.1} parent=1 // pred_fallthru
      _
    // Predicated region
    $region26: #{tpu_custom_call.1} parent=1 // pred_check
      _
    $region27: #{tpu_custom_call.1} parent=1 // pred_check_branch
      %38 = sbr.rel target = $region29
    $region28: #{tpu_custom_call.1} parent=1 // pred_region
      %39 = sst [smem:[#allocation10]] [#allocation9]
      %40 = sst [smem:[#allocation11]] [#allocation8]
    $region29: #{tpu_custom_call.1} parent=1 // pred_fallthru
      _
    %42 = shalt.err (0)
    %s44 = sshll.u32 [#allocation2], 4
    %s45 = int_to_ptr.vmem [resolvable:$true] %s44
    %47 = dma.hbm_to_vmem [thread:$0]  %s4, 1024, %s45, [#allocation3]
    %v48 = vld [vmem:[%s0] sm:$0xff]
    %v49 = vld [vmem:[%s1] sm:$0x1]
    %v50 = vld [vmem:[#allocation4] sm:$0xf]
    %v51 = vld [vmem:[#allocation4 + $0x4] sm:$0xf]
    %v52 = vld [vmem:[#allocation4 + $0x8] sm:$0xf]
    %v53 = vld [vmem:[#allocation4 + $0xc] sm:$0xf]
    %v54 = vld [vmem:[#allocation4 + $0x10] sm:$0xf]
    %v55 = vld [vmem:[#allocation4 + $0x14] sm:$0xf]
    %v56 = vld [vmem:[#allocation4 + $0x18] sm:$0xf]
    %v57 = vld [vmem:[#allocation4 + $0x1c] sm:$0xf]
    %v58 = vld [vmem:[#allocation4 + $0x20] sm:$0xf]
    %v59 = vld [vmem:[#allocation4 + $0x24] sm:$0xf]
    %v60 = vld [vmem:[#allocation4 + $0x28] sm:$0xf]
    %v61 = vld [vmem:[#allocation4 + $0x2c] sm:$0xf]
    %v62 = vld [vmem:[#allocation4 + $0x30] sm:$0xf]
    %v63 = vld [vmem:[#allocation4 + $0x34] sm:$0xf]
    %v64 = vld [vmem:[#allocation4 + $0x38] sm:$0xf]
    %v65 = vld [vmem:[#allocation4 + $0x3c] sm:$0xf]
    %v66 = vld [vmem:[#allocation4 + $0x40] sm:$0xf]
    %v67 = vld [vmem:[#allocation4 + $0x44] sm:$0xf]
    %v68 = vld [vmem:[#allocation4 + $0x48] sm:$0xf]
    %v69 = vld [vmem:[#allocation4 + $0x4c] sm:$0xf]
    %v70 = vld [vmem:[#allocation4 + $0x50] sm:$0xf]
    %v71 = vld [vmem:[#allocation4 + $0x54] sm:$0xf]
    %v72 = vld [vmem:[#allocation4 + $0x58] sm:$0xf]
    %v73 = vld [vmem:[#allocation4 + $0x5c] sm:$0xf]
    %v74 = vld [vmem:[#allocation4 + $0x60] sm:$0xf]
    %v75 = vld [vmem:[#allocation4 + $0x64] sm:$0xf]
    %v76 = vld [vmem:[#allocation4 + $0x68] sm:$0xf]
    %v77 = vld [vmem:[#allocation4 + $0x6c] sm:$0xf]
    %v78 = vld [vmem:[#allocation4 + $0x70] sm:$0xf]
    %v79 = vld [vmem:[#allocation4 + $0x74] sm:$0xf]
    %v80 = vld [vmem:[#allocation4 + $0x78] sm:$0xf]
    %v81 = vld [vmem:[#allocation4 + $0x7c] sm:$0xf]
    %83 = vset.pattern.permute.xlu0 0
    %84 = vperm.xlu0 %83, %v48
    %v85 = vpop.permute.xlu0 %84
    %v88 = vlaneseq
    %v89 = vshrl.u32 %v88, 7
    %v90 = vsub.s32 0, %v89
    %v91 = vrot.slane %v49, %v90
    %v93 = vmul.f32 %v85, %v91
    %v94 = vand.u32 2147483647, %v93
    %vm95 = vcmp.le.f32.partialorder %v94, 0.7853982
    %vm96 = vcmp.lt.s32.totalorder %v93, 0
    %v97 = vand.u32 %v93, 2139095040
    %v98 = vshrl.u32 %v97, 23
    %v99 = vsub.s32 %v98, 127
    %v100 = vand.u32 2147483647, %v93
    %v101 = vand.u32 %v100, 8388607
    %v102 = vor.u32 %v101, 8388608
    %v103 = vsub.s32 0, %v102
    %v104 = vadd.s32 %v99, 1
    %vm105 = vcmp.gt.s32.totalorder %v104, 0
    %v106 = vsel %vm105, %v104, 0
    %v107 = vshrl.u32 %v106, 5
    %v108 = vand.u32 %v106, 31
    %v109 = vsub.s32 32, %v108
    %v110 = vshrl.u32 683565275, %v109
    %v111 = vshll.u32 683565275, %v108
    %v112 = vshrl.u32 2475754826, %v109
    %v113 = vor.u32 %v111, %v112
    %v114 = vshll.u32 2475754826, %v108
    %v115 = vshrl.u32 2131351028, %v109
    %v116 = vor.u32 %v114, %v115
    %v117 = vshll.u32 2131351028, %v108
    %v118 = vshrl.u32 2102212464, %v109
    %v119 = vor.u32 %v117, %v118
    %v120 = vshll.u32 2102212464, %v108
    %v121 = vshrl.u32 920167782, %v109
    %v122 = vor.u32 %v120, %v121
    %v123 = vshll.u32 920167782, %v108
    %v124 = vshrl.u32 1326507024, %v109
    %v125 = vor.u32 %v123, %v124
    %vm126 = vcmp.lt.s32.totalorder %v107, 1
    %vm127 = vcmp.lt.s32.totalorder %v107, 2
    %vm128 = vcmp.lt.s32.totalorder %v107, 3
    %vm129 = vcmp.lt.s32.totalorder %v107, 4
    %v130 = vsel %vm126, %v110, %v113
    %v131 = vsel %vm129, %v119, 2102212464
    %v132 = vsel %vm128, %v116, %v131
    %v133 = vsel %vm127, %v130, %v132
    %v134 = vsel %vm126, %v113, %v116
    %v135 = vsel %vm129, %v122, 920167782
    %v136 = vsel %vm128, %v119, %v135
    %v137 = vsel %vm127, %v134, %v136
    %v138 = vsel %vm126, %v116, %v119
    %v139 = vsel %vm129, %v125, 1326507024
    %v140 = vsel %vm128, %v122, %v139
    %v141 = vsel %vm127, %v138, %v140
    %v142 = vshll.u32 %v102, 8
    %v143 = vmul.u32.u64.compose %v142, %v141
    %v144 = vextract.low.u32 %v143
    %v145 = vextract.high.u32 %v143
    %v146 = vmul.u32.u64.compose %v142, %v137
    %v147 = vextract.low.u32 %v146
    %v148 = vextract.high.u32 %v146
    %v149 = vmul.u32 %v142, %v133
    %v150 = vadd.s32 %v145, %v147
    %vm151 = vc.u32 %v145, %v147
    %v152 = vadd.s32 %v148, 1
    %v153 = vsel %vm151, %v152, %v148
    %v154 = vadd.s32 %v149, %v153
    %v155 = vadd.s32 %v154, 536870912
    %v156 = vshrl.u32 %v155, 30
    %v157 = vshll.u32 %v156, 30
    %v158 = vsub.s32 %v154, %v157
    %vm159 = vcmp.lt.s32.totalorder %v158, 0
    %v160 = vsub.s32 0, %v158
    %v161 = vsel %vm159, %v160, %v158
    %v162 = vclz %v161
    %v163 = vsub.s32 %v162, 2
    %vm164 = vcmp.gt.s32.totalorder 0, %v163
    %v165 = vsel %vm164, 0, %v163
    %v166 = vsub.s32 32, %v165
    %v167 = vshll.u32 %v158, %v165
    %v168 = vshrl.u32 %v150, %v166
    %v169 = vor.u32 %v167, %v168
    %v170 = vsub.s32 4294967266, %v165
    %v171 = vadd.s32 %v170, 127
    %v172 = vshll.u32 %v171, 23
    %v173 = vor.u32 4788187, %v172
    %v174 = vand.u32 2147483647, %v173
    %v176 = vcvt.s32.f32 %v169
    %v177 = vmul.f32 %v176, %v174
    %v178 = vxor.u32 %v177, 2147483648
    %v179 = vsel %vm96, %v178, %v177
    %v180 = vsub.s32 4, %v156
    %v181 = vsel %vm96, %v180, %v156
    %v182 = vsel %vm95, %v93, %v179
    %v183 = vsel %vm95, 0, %v181
    %v184 = vcosq.f32.pop %v182
    %v185 = vsinq.f32.pop %v182
    %vm186 = vweird.f32 %v93
    %v187 = vand.u32 %v183, 3
    %vm188 = vcmp.lt.s32.totalorder %v187, 2
    %vm189 = vcmp.eq.s32.totalorder %v187, 0
    %v190 = vxor.u32 %v185, 2147483648
    %v191 = vsel %vm189, %v184, %v190
    %vm192 = vcmp.eq.s32.totalorder %v187, 2
    %v193 = vxor.u32 %v184, 2147483648
    %v194 = vsel %vm192, %v193, %v185
    %v195 = vsel %vm188, %v191, %v194
    %v196 = vsel %vm186, nan, %v195
    %v197 = vpack.c.bf16 %v196, %v196
    %v198 = vand.u32 2147483647, %v93
    %vm199 = vcmp.le.f32.partialorder %v198, 0.7853982
    %vm200 = vcmp.lt.s32.totalorder %v93, 0
    %v201 = vand.u32 %v93, 2139095040
    %v202 = vshrl.u32 %v201, 23
    %v203 = vsub.s32 %v202, 127
    %v204 = vand.u32 2147483647, %v93
    %v205 = vand.u32 %v204, 8388607
    %v206 = vor.u32 %v205, 8388608
    %v207 = vsub.s32 0, %v206
    %v208 = vadd.s32 %v203, 1
    %vm209 = vcmp.gt.s32.totalorder %v208, 0
    %v210 = vsel %vm209, %v208, 0
    %v211 = vshrl.u32 %v210, 5
    %v212 = vand.u32 %v210, 31
    %v213 = vsub.s32 32, %v212
    %v214 = vshrl.u32 683565275, %v213
    %v215 = vshll.u32 683565275, %v212
    %v216 = vshrl.u32 2475754826, %v213
    %v217 = vor.u32 %v215, %v216
    %v218 = vshll.u32 2475754826, %v212
    %v219 = vshrl.u32 2131351028, %v213
    %v220 = vor.u32 %v218, %v219
    %v221 = vshll.u32 2131351028, %v212
    %v222 = vshrl.u32 2102212464, %v213
    %v223 = vor.u32 %v221, %v222
    %v224 = vshll.u32 2102212464, %v212
    %v225 = vshrl.u32 920167782, %v213
    %v226 = vor.u32 %v224, %v225
    %v227 = vshll.u32 920167782, %v212
    %v228 = vshrl.u32 1326507024, %v213
    %v229 = vor.u32 %v227, %v228
    %vm230 = vcmp.lt.s32.totalorder %v211, 1
    %vm231 = vcmp.lt.s32.totalorder %v211, 2
    %vm232 = vcmp.lt.s32.totalorder %v211, 3
    %vm233 = vcmp.lt.s32.totalorder %v211, 4
    %v234 = vsel %vm230, %v214, %v217
    %v235 = vsel %vm233, %v223, 2102212464
    %v236 = vsel %vm232, %v220, %v235
    %v237 = vsel %vm231, %v234, %v236
    %v238 = vsel %vm230, %v217, %v220
    %v239 = vsel %vm233, %v226, 920167782
    %v240 = vsel %vm232, %v223, %v239
    %v241 = vsel %vm231, %v238, %v240
    %v242 = vsel %vm230, %v220, %v223
    %v243 = vsel %vm233, %v229, 1326507024
    %v244 = vsel %vm232, %v226, %v243
    %v245 = vsel %vm231, %v242, %v244
    %v246 = vshll.u32 %v206, 8
    %v247 = vmul.u32.u64.compose %v246, %v245
    %v248 = vextract.low.u32 %v247
    %v249 = vextract.high.u32 %v247
    %v250 = vmul.u32.u64.compose %v246, %v241
    %v251 = vextract.low.u32 %v250
    %v252 = vextract.high.u32 %v250
    %v253 = vmul.u32 %v246, %v237
    %v254 = vadd.s32 %v249, %v251
    %vm255 = vc.u32 %v249, %v251
    %v256 = vadd.s32 %v252, 1
    %v257 = vsel %vm255, %v256, %v252
    %v258 = vadd.s32 %v253, %v257
    %v259 = vadd.s32 %v258, 536870912
    %v260 = vshrl.u32 %v259, 30
    %v261 = vshll.u32 %v260, 30
    %v262 = vsub.s32 %v258, %v261
    %vm263 = vcmp.lt.s32.totalorder %v262, 0
    %v264 = vsub.s32 0, %v262
    %v265 = vsel %vm263, %v264, %v262
    %v266 = vclz %v265
    %v267 = vsub.s32 %v266, 2
    %vm268 = vcmp.gt.s32.totalorder 0, %v267
    %v269 = vsel %vm268, 0, %v267
    %v270 = vsub.s32 32, %v269
    %v271 = vshll.u32 %v262, %v269
    %v272 = vshrl.u32 %v254, %v270
    %v273 = vor.u32 %v271, %v272
    %v274 = vsub.s32 4294967266, %v269
    %v275 = vadd.s32 %v274, 127
    %v276 = vshll.u32 %v275, 23
    %v277 = vor.u32 4788187, %v276
    %v278 = vand.u32 2147483647, %v277
    %v280 = vcvt.s32.f32 %v273
    %v281 = vmul.f32 %v280, %v278
    %v282 = vxor.u32 %v281, 2147483648
    %v283 = vsel %vm200, %v282, %v281
    %v284 = vsub.s32 4, %v260
    %v285 = vsel %vm200, %v284, %v260
    %v286 = vsel %vm199, %v93, %v283
    %v287 = vsel %vm199, 0, %v285
    %v288 = vcosq.f32.pop %v286
    %v289 = vsinq.f32.pop %v286
    %vm290 = vweird.f32 %v93
    %v291 = vadd.s32 %v287, 3
    %v292 = vand.u32 %v291, 3
    %vm293 = vcmp.lt.s32.totalorder %v292, 2
    %vm294 = vcmp.eq.s32.totalorder %v292, 0
    %v295 = vxor.u32 %v289, 2147483648
    %v296 = vsel %vm294, %v288, %v295
    %vm297 = vcmp.eq.s32.totalorder %v292, 2
    %v298 = vxor.u32 %v288, 2147483648
    %v299 = vsel %vm297, %v298, %v289
    %v300 = vsel %vm293, %v296, %v299
    %v301 = vsel %vm290, nan, %v300
    %v302 = vpack.c.bf16 %v301, %v301
    %v303 = vld [vmem:[%s3] sm:$0x1]
    %v305 = vlaneseq
    %v306 = vshrl.u32 %v305, 7
    %v307 = vsub.s32 0, %v306
    %v308 = vrot.slane %v303, %v307
    %v342 = vunpack.c.l.b16 %v50
    %v343 = vunpack.c.l.b16 %v51
    %v344 = vunpack.c.l.b16 %v52
    %v345 = vunpack.c.l.b16 %v53
    %v346 = vunpack.c.l.b16 %v54
    %v347 = vunpack.c.l.b16 %v55
    %v348 = vunpack.c.l.b16 %v56
    %v349 = vunpack.c.l.b16 %v57
    %v350 = vunpack.c.l.b16 %v58
    %v351 = vunpack.c.l.b16 %v59
    %v352 = vunpack.c.l.b16 %v60
    %v353 = vunpack.c.l.b16 %v61
    %v354 = vunpack.c.l.b16 %v62
    %v355 = vunpack.c.l.b16 %v63
    %v356 = vunpack.c.l.b16 %v64
    %v357 = vunpack.c.l.b16 %v65
    %v358 = vunpack.c.l.b16 %v66
    %v359 = vunpack.c.l.b16 %v67
    %v360 = vunpack.c.l.b16 %v68
    %v361 = vunpack.c.l.b16 %v69
    %v362 = vunpack.c.l.b16 %v70
    %v363 = vunpack.c.l.b16 %v71
    %v364 = vunpack.c.l.b16 %v72
    %v365 = vunpack.c.l.b16 %v73
    %v366 = vunpack.c.l.b16 %v74
    %v367 = vunpack.c.l.b16 %v75
    %v368 = vunpack.c.l.b16 %v76
    %v369 = vunpack.c.l.b16 %v77
    %v370 = vunpack.c.l.b16 %v78
    %v371 = vunpack.c.l.b16 %v79
    %v372 = vunpack.c.l.b16 %v80
    %v373 = vunpack.c.l.b16 %v81
    %v374 = vpack.c.b16 %v343, %v342
    %v375 = vpack.c.b16 %v345, %v344
    %v376 = vpack.c.b16 %v347, %v346
    %v377 = vpack.c.b16 %v349, %v348
    %v378 = vpack.c.b16 %v351, %v350
    %v379 = vpack.c.b16 %v353, %v352
    %v380 = vpack.c.b16 %v355, %v354
    %v381 = vpack.c.b16 %v357, %v356
    %v382 = vpack.c.b16 %v359, %v358
    %v383 = vpack.c.b16 %v361, %v360
    %v384 = vpack.c.b16 %v363, %v362
    %v385 = vpack.c.b16 %v365, %v364
    %v386 = vpack.c.b16 %v367, %v366
    %v387 = vpack.c.b16 %v369, %v368
    %v388 = vpack.c.b16 %v371, %v370
    %v389 = vpack.c.b16 %v373, %v372
    %406 = vmatprep.subr.bf16.mxu0 0
    %407 = vmatpush1.bf16.msra.mxu0 %v381
    %408 = vmatprep.subr.bf16.mxu0 0
    %409 = vmatpush1.bf16.msra.mxu0 %v380
    %410 = vmatprep.subr.bf16.mxu0 0
    %411 = vmatpush1.bf16.msra.mxu0 %v379
    %412 = vmatprep.subr.bf16.mxu0 0
    %413 = vmatpush1.bf16.msra.mxu0 %v378
    %414 = vmatprep.subr.bf16.mxu0 0
    %415 = vmatpush1.bf16.msra.mxu0 %v377
    %416 = vmatprep.subr.bf16.mxu0 0
    %417 = vmatpush1.bf16.msra.mxu0 %v376
    %418 = vmatprep.subr.bf16.mxu0 0
    %419 = vmatpush1.bf16.msra.mxu0 %v375
    %420 = vmatprep.subr.bf16.mxu0 0
    %421 = vmatpush1.bf16.msra.mxu0 %v374
    %422 = vmatprep.subr.bf16.mxu0 0
    %423 = vmatpush2.bf16.msra.mxu0 %v389
    %424 = vmatprep.subr.bf16.mxu0 0
    %425 = vmatpush2.bf16.msra.mxu0 %v388
    %426 = vmatprep.subr.bf16.mxu0 0
    %427 = vmatpush2.bf16.msra.mxu0 %v387
    %428 = vmatprep.subr.bf16.mxu0 0
    %429 = vmatpush2.bf16.msra.mxu0 %v386
    %430 = vmatprep.subr.bf16.mxu0 0
    %431 = vmatpush2.bf16.msra.mxu0 %v385
    %432 = vmatprep.subr.bf16.mxu0 0
    %433 = vmatpush2.bf16.msra.mxu0 %v384
    %434 = vmatprep.subr.bf16.mxu0 0
    %435 = vmatpush2.bf16.msra.mxu0 %v383
    %436 = vmatprep.subr.bf16.mxu0 0
    %437 = vmatpush2.bf16.msra.mxu0 %v382
    %438 = vmatprep.mubr.bf16.mxu0 %v302
    %439 = vmatmul.mubr.bf16.gmra.mxu0 %v197
    %v440 = vpop.f32.mrf.mxu0
    %v441 = vadd.f32 %v308, %v440
    %v442 = vpop.f32.mrf.mxu0
    %v443 = vpop.f32.mrf.mxu0
    %v444 = vpop.f32.mrf.mxu0
    %445 = vdwg.mxu0
    %v446 = vxor.u32 %v441, 2147483648
    %v447 = vmul.f32 %v446, 1.442695
    %v448 = vpow.pop %v447
    %v449 = vadd.f32 %v448, 1.0
    %v450 = vrcp.pop %v449
    %v451 = vmul.f32 1.0, %v450
    %v452 = vmul.f32 %v441, %v451
    %s453 = smul.u32 4, 16
    %s454 = smul.u32 %s453, 1
    %s455 = sshll.u32 %s454, 4
    %456 = dma.done [#allocation3], %s455
    %v457 = vld [vmem:[#allocation2] sm:$0xf]
    %v458 = vld [vmem:[#allocation2 + $0x4] sm:$0xf]
    %v459 = vld [vmem:[#allocation2 + $0x8] sm:$0xf]
    %v460 = vld [vmem:[#allocation2 + $0xc] sm:$0xf]
    %v461 = vld [vmem:[#allocation2 + $0x10] sm:$0xf]
    %v462 = vld [vmem:[#allocation2 + $0x14] sm:$0xf]
    %v463 = vld [vmem:[#allocation2 + $0x18] sm:$0xf]
    %v464 = vld [vmem:[#allocation2 + $0x1c] sm:$0xf]
    %v465 = vld [vmem:[#allocation2 + $0x20] sm:$0xf]
    %v466 = vld [vmem:[#allocation2 + $0x24] sm:$0xf]
    %v467 = vld [vmem:[#allocation2 + $0x28] sm:$0xf]
    %v468 = vld [vmem:[#allocation2 + $0x2c] sm:$0xf]
    %v469 = vld [vmem:[#allocation2 + $0x30] sm:$0xf]
    %v470 = vld [vmem:[#allocation2 + $0x34] sm:$0xf]
    %v471 = vld [vmem:[#allocation2 + $0x38] sm:$0xf]
    %v472 = vld [vmem:[#allocation2 + $0x3c] sm:$0xf]
    %v473 = vpack.c.bf16 %v452, %v452
    %v474 = vld [vmem:[%s5] sm:$0x1]
    %v476 = vlaneseq
    %v477 = vshrl.u32 %v476, 7
    %v478 = vsub.s32 0, %v477
    %v479 = vrot.slane %v474, %v478
    %v497 = vunpack.c.l.b16 %v457
    %v498 = vunpack.c.l.b16 %v458
    %v499 = vunpack.c.l.b16 %v459
    %v500 = vunpack.c.l.b16 %v460
    %v501 = vunpack.c.l.b16 %v461
    %v502 = vunpack.c.l.b16 %v462
    %v503 = vunpack.c.l.b16 %v463
    %v504 = vunpack.c.l.b16 %v464
    %v505 = vunpack.c.l.b16 %v465
    %v506 = vunpack.c.l.b16 %v466
    %v507 = vunpack.c.l.b16 %v467
    %v508 = vunpack.c.l.b16 %v468
    %v509 = vunpack.c.l.b16 %v469
    %v510 = vunpack.c.l.b16 %v470
    %v511 = vunpack.c.l.b16 %v471
    %v512 = vunpack.c.l.b16 %v472
    %v513 = vpack.c.b16 %v498, %v497
    %v514 = vpack.c.b16 %v500, %v499
    %v515 = vpack.c.b16 %v502, %v501
    %v516 = vpack.c.b16 %v504, %v503
    %v517 = vpack.c.b16 %v506, %v505
    %v518 = vpack.c.b16 %v508, %v507
    %v519 = vpack.c.b16 %v510, %v509
    %v520 = vpack.c.b16 %v512, %v511
    %529 = vmatprep.subr.bf16.mxu0 0
    %530 = vmatpush1.bf16.msra.mxu0 %v520
    %531 = vmatprep.subr.bf16.mxu0 0
    %532 = vmatpush1.bf16.msra.mxu0 %v519
    %533 = vmatprep.subr.bf16.mxu0 0
    %534 = vmatpush1.bf16.msra.mxu0 %v518
    %535 = vmatprep.subr.bf16.mxu0 0
    %536 = vmatpush1.bf16.msra.mxu0 %v517
    %537 = vmatprep.subr.bf16.mxu0 0
    %538 = vmatpush1.bf16.msra.mxu0 %v516
    %539 = vmatprep.subr.bf16.mxu0 0
    %540 = vmatpush1.bf16.msra.mxu0 %v515
    %541 = vmatprep.subr.bf16.mxu0 0
    %542 = vmatpush1.bf16.msra.mxu0 %v514
    %543 = vmatprep.subr.bf16.mxu0 0
    %544 = vmatpush1.bf16.msra.mxu0 %v513
    %545 = vmatprep.subr.bf16.mxu0 0
    %546 = vmatpush2.bf16.msra.mxu0 0
    %547 = vmatprep.subr.bf16.mxu0 0
    %548 = vmatpush2.bf16.msra.mxu0 0
    %549 = vmatprep.subr.bf16.mxu0 0
    %550 = vmatpush2.bf16.msra.mxu0 0
    %551 = vmatprep.subr.bf16.mxu0 0
    %552 = vmatpush2.bf16.msra.mxu0 0
    %553 = vmatprep.subr.bf16.mxu0 0
    %554 = vmatpush2.bf16.msra.mxu0 0
    %555 = vmatprep.subr.bf16.mxu0 0
    %556 = vmatpush2.bf16.msra.mxu0 0
    %557 = vmatprep.subr.bf16.mxu0 0
    %558 = vmatpush2.bf16.msra.mxu0 0
    %559 = vmatprep.subr.bf16.mxu0 0
    %560 = vmatpush2.bf16.msra.mxu0 0
    %561 = vmatprep.mubr.bf16.mxu0 0
    %562 = vmatmul.mubr.bf16.gmra.mxu0 %v473
    %v563 = vpop.f32.mrf.mxu0
    %v564 = vadd.f32 %v479, %v563
    %v565 = vpop.f32.mrf.mxu0
    %v566 = vpop.f32.mrf.mxu0
    %v567 = vpop.f32.mrf.mxu0
    %568 = vdwg.mxu0
    %569 = vst [vmem:[#allocation7] sm:$0xff] %v564
    // Predicated region
    $region30: #{tpu_custom_call.1} parent=1 // pred_check
      _
    $region31: #{tpu_custom_call.1} parent=1 // pred_check_branch
      %571 = sbr.rel (0) target = $region33
    $region32: #{tpu_custom_call.1} parent=1 // pred_region
      %s573 = ssub.s32 128, 128
      %574 = vsyncadd [#allocation6], %s573
      %s576 = sshll.u32 [#allocation7], 4
      %s577 = int_to_ptr.vmem [resolvable:$true] %s576
      %579 = dma.vmem_to_hbm [thread:$0]  %s577, 128, %s6, [#allocation6]
    $region33: #{tpu_custom_call.1} parent=1 // pred_fallthru
      _
    // Predicated region
    $region34: #{tpu_custom_call.1} parent=1 // pred_check
      _
    $region35: #{tpu_custom_call.1} parent=1 // pred_check_branch
      %581 = sbr.rel (0) target = $region37
    $region36: #{tpu_custom_call.1} parent=1 // pred_region
      %582 = dma.done [#allocation6], 128
    $region37: #{tpu_custom_call.1} parent=1 // pred_fallthru
      _
    %583 = vsyncpa [#allocation5], 1
    %584 = vsyncpa [#allocation6], 1
  %585 = vsyncmov [#allocation3]
  %s586 = vpop.sfrf %585
  %p587 = scmp.eq.s32.totalorder %s586, 0
  %p588 = pneg %p587
  %590 = shalt.err (%p588)

</llo_original>
